<compile_context>
chip_gen: v7x
topology: tpu7x:2x2x1
jax: 0.10.0
libtpu: 0.0.40
codegen_flags: <defaults>
</compile_context>

<pallas_src>
import functools
import math

import jax
import jax.numpy as jnp
from jax import lax
from jax.experimental import pallas as pl
from jax.experimental.pallas import tpu as pltpu

_NEG_BIG = -1e30  # large finite negative for the causal mask (no inf-inf NaN risk)


def _tile(n, preferred, align):
    """Largest multiple of `align` that divides n and is <= max(preferred, align).
    Falls back to n (full extent, always legal) when n is not a multiple of
    `align` — avoids degenerate tiny tiles and lane-sparse score tiles."""
    if n % align != 0:
        return n  # TODO(synk): pad + mask the tail instead of one full-extent tile.
    t = min((max(preferred, align) // align) * align, n)
    while t >= align:
        if n % t == 0:
            return t
        t -= align
    return n


# ---------------------------------------------------------------------------
# Kernel 1: QKV projection — three lane-dense outputs, no wrapper-side slicing
# ---------------------------------------------------------------------------
def _qkv_proj_kernel(x_ref, wq_ref, wk_ref, wv_ref, q_ref, k_ref, v_ref):
    x = x_ref[...]
    q_ref[...] = jnp.dot(x, wq_ref[...], preferred_element_type=jnp.float32).astype(q_ref.dtype)
    k_ref[...] = jnp.dot(x, wk_ref[...], preferred_element_type=jnp.float32).astype(k_ref.dtype)
    v_ref[...] = jnp.dot(x, wv_ref[...], preferred_element_type=jnp.float32).astype(v_ref.dtype)


def _qkv_projection(x2d, wq, wk, wv, *, block_rows=256, block_n=512):
    rows, d_in = x2d.shape
    d_out = wq.shape[1]
    row_align = 16 if x2d.dtype.itemsize == 2 else 8
    tm = _tile(rows, block_rows, row_align)
    tn = _tile(d_out, block_n, 128)   # N-axis tiling keeps weight tiles VMEM-sized (v7x: 64 MiB)
    # TODO(synk): add a K (d_in) grid axis with an f32 VMEM accumulator when d_in is
    # large enough that a (d_in, tn) weight tile no longer fits comfortably in VMEM.
    out = jax.ShapeDtypeStruct((rows, d_out), x2d.dtype)
    return pl.pallas_call(
        _qkv_proj_kernel,
        out_shape=(out, out, out),
        grid_spec=pltpu.PrefetchScalarGridSpec(
            num_scalar_prefetch=0,
            grid=(rows // tm, d_out // tn),
            in_specs=[
                pl.BlockSpec((tm, d_in), lambda i, j: (i, 0)),
                pl.BlockSpec((d_in, tn), lambda i, j: (0, j)),
                pl.BlockSpec((d_in, tn), lambda i, j: (0, j)),
                pl.BlockSpec((d_in, tn), lambda i, j: (0, j)),
            ],
            out_specs=[pl.BlockSpec((tm, tn), lambda i, j: (i, j)) for _ in range(3)],
        ),
        compiler_params=pltpu.CompilerParams(
            dimension_semantics=("parallel", "parallel")),
    )(x2d, wq, wk, wv)


# ---------------------------------------------------------------------------
# Kernel 2: flash-attention style causal core, flattened lower-triangular grid
# ---------------------------------------------------------------------------
def _flash_causal_kernel(qi_tbl, ki_tbl, seed_ref, q_ref, k_ref, v_ref, o_ref,
                         m_sc, l_sc, acc_sc, *, tq, tk, dropout_p, prob_dtype,
                         approx_recip):
    b = pl.program_id(0)
    pidx = pl.program_id(1)
    qi = qi_tbl[pidx]
    ki = ki_tbl[pidx]
    last_ki = (qi * tq + tq - 1) // tk   # last KV tile needed for this q tile

    @pl.when(ki == 0)
    def _init():
        m_sc[...] = jnp.full((tq, 1), _NEG_BIG, jnp.float32)
        l_sc[...] = jnp.zeros((tq, 1), jnp.float32)
        acc_sc[...] = jnp.zeros(acc_sc.shape, jnp.float32)
        if dropout_p > 0.0:
            # TODO(synk): torch's RNG stream is not reproduced; TPU HW PRNG,
            # seeded once per (batch, q-tile); the stream advances across KV steps.
            pltpu.prng_seed(seed_ref[0] + b * 1000003 + qi)

    q = q_ref[0]   # (tq, d) — already scaled by 1/sqrt(d_out) via W_Query
    k = k_ref[0]   # (tk, d)
    v = v_ref[0]   # (tk, d)

    # QK^T without materializing k.T: contract the feature dim directly.
    s = lax.dot_general(q, k, (((1,), (1,)), ((), ())),
                        preferred_element_type=jnp.float32)  # (tq, tk), f32

    # Build/apply the causal mask only on diagonal-straddling tiles; tiles fully
    # below the diagonal skip the iota/compare/select VPU work entirely.
    def _mask(t):
        row = lax.broadcasted_iota(jnp.int32, (tq, tk), 0) + qi * tq
        col = lax.broadcasted_iota(jnp.int32, (tq, tk), 1) + ki * tk
        return jnp.where(col > row, _NEG_BIG, t)

    s = lax.cond(ki * tk + tk - 1 > qi * tq, _mask, lambda t: t, s)

    m_prev = m_sc[...]
    m_new = jnp.maximum(m_prev, jnp.max(s, axis=-1, keepdims=True))
    alpha = jnp.exp(m_prev - m_new)
    # exp in prob_dtype (bf16 on v6e/v7x for small head dims -> EUP bf16 path,
    # and p feeds the PV matmul without a cast). Denominator accumulates in f32.
    p = jnp.exp((s - m_new).astype(prob_dtype))

    l_sc[...] = alpha * l_sc[...] + jnp.sum(p, axis=-1, keepdims=True, dtype=jnp.float32)

    if dropout_p > 0.0:
        keep = pltpu.stateful_bernoulli(p=1.0 - dropout_p, shape=p.shape)
        p = p * keep.astype(p.dtype)   # 1/(1-p) keep-scale folded into finalize

    if p.dtype != v.dtype:
        p = p.astype(v.dtype)
    acc_sc[...] = alpha * acc_sc[...] + jnp.dot(p, v, preferred_element_type=jnp.float32)
    m_sc[...] = m_new

    @pl.when(ki == last_ki)
    def _finalize():
        l = l_sc[...]
        inv_l = pl.reciprocal(l, approx=True) if approx_recip else 1.0 / l
        out = acc_sc[...] * inv_l
        if dropout_p > 0.0:
            out = out * (1.0 / (1.0 - dropout_p))
        o_ref[0] = out.astype(o_ref.dtype)


def causal_attention(x, wq, wk, wv, *, dropout_p=0.0, seed=0,
                     block_q=256, block_kv=256, prob_dtype=None,
                     approx_recip=True, vmem_limit_bytes=None):
    """x: [B, T, d_in]; wq/wk/wv: [d_in, d_out] (already transposed from torch).

    block_q/block_kv: sequence-axis tile sizes (~256 is a good v7x default; 512+
    works on v5e/v6e with a raised vmem_limit_bytes). prob_dtype=None picks bf16
    probabilities for bf16 inputs (v6e/v7x EUP-bound regime); pass jnp.float32
    to force f32 probabilities (recommended on v5e).
    """
    B, T, d_in = x.shape
    d_out = wq.shape[1]
    scale = 1.0 / math.sqrt(d_out)

    # Fold the 1/sqrt(d_out) scale into W_Query; keep weights in the input dtype.
    wq_s = (wq * scale).astype(x.dtype)
    wk_c = wk.astype(x.dtype)
    wv_c = wv.astype(x.dtype)

    # Three separate projection outputs; reshape (B*T, d) -> (B, T, d) is free.
    q2, k2, v2 = _qkv_projection(x.reshape(B * T, d_in), wq_s, wk_c, wv_c)
    q = q2.reshape(B, T, d_out)
    k = k2.reshape(B, T, d_out)
    v = v2.reshape(B, T, d_out)

    seq_align = 16 if x.dtype.itemsize == 2 else 8
    tq = _tile(T, block_q, seq_align)
    tk = _tile(T, block_kv, 128)      # lane-dense (tq, tk) score/probability tiles
    nq, nk = T // tq, T // tk

    # Flattened lower-triangular (qi, ki) tile pairs: upper-triangle tiles never
    # enter the grid, so they cost neither a pipeline step nor a K/V DMA.
    qi_list, ki_list = [], []
    for qi in range(nq):
        last = min((qi * tq + tq - 1) // tk, nk - 1)
        for ki in range(last + 1):
            qi_list.append(qi)
            ki_list.append(ki)
    qi_tbl = jnp.asarray(qi_list, dtype=jnp.int32)
    ki_tbl = jnp.asarray(ki_list, dtype=jnp.int32)
    n_pairs = len(qi_list)
    seed_arr = jnp.asarray([seed], dtype=jnp.int32)

    if prob_dtype is None:
        prob_dtype = jnp.bfloat16 if x.dtype == jnp.bfloat16 else jnp.float32

    kernel = functools.partial(
        _flash_causal_kernel, tq=tq, tk=tk, dropout_p=float(dropout_p),
        prob_dtype=prob_dtype, approx_recip=approx_recip)

    # NOTE: only the batch axis is "parallel" here; on v7x (2 TCs/chip) prefer
    # B >= 2 so both TensorCores get work.
    return pl.pallas_call(
        kernel,
        out_shape=jax.ShapeDtypeStruct((B, T, d_out), x.dtype),
        grid_spec=pltpu.PrefetchScalarGridSpec(
            num_scalar_prefetch=3,
            grid=(B, n_pairs),
            in_specs=[
                pl.BlockSpec((1, tq, d_out), lambda b, p, qt, kt, s: (b, qt[p], 0)),
                pl.BlockSpec((1, tk, d_out), lambda b, p, qt, kt, s: (b, kt[p], 0)),
                pl.BlockSpec((1, tk, d_out), lambda b, p, qt, kt, s: (b, kt[p], 0)),
            ],
            out_specs=pl.BlockSpec((1, tq, d_out), lambda b, p, qt, kt, s: (b, qt[p], 0)),
            scratch_shapes=[
                pltpu.VMEM((tq, 1), jnp.float32),       # running max m
                pltpu.VMEM((tq, 1), jnp.float32),       # running sum l
                pltpu.VMEM((tq, d_out), jnp.float32),   # f32 accumulator
            ],
        ),
        compiler_params=pltpu.CompilerParams(
            dimension_semantics=("parallel", "arbitrary"),
            vmem_limit_bytes=vmem_limit_bytes,
        ),
    )(qi_tbl, ki_tbl, seed_arr, q, k, v)


def causal_attention_ref(x, wq, wk, wv):
    """Pure-JAX reference (dropout disabled) for correctness checks."""
    x = x.astype(jnp.float32)
    q = x @ wq.astype(jnp.float32)
    k = x @ wk.astype(jnp.float32)
    v = x @ wv.astype(jnp.float32)
    scores = jnp.einsum("btd,bsd->bts", q, k)
    T = x.shape[1]
    mask = jnp.triu(jnp.ones((T, T), dtype=bool), k=1)
    scores = jnp.where(mask[None], -jnp.inf, scores)
    attn = jax.nn.softmax(scores / math.sqrt(wq.shape[1]), axis=-1)
    return attn @ v


if __name__ == "__main__":
    # small shapes consistent with the module: batch=2, seq=8, d_in=32, d_out=32
    B, T, d_in, d_out = 2, 8, 32, 32
    dropout = 0.0  # eval-style / p=0 so results are deterministic & comparable

    key = jax.random.PRNGKey(0)
    kx, kq, kk, kv_ = jax.random.split(key, 4)

    x = jax.random.normal(kx, (B, T, d_in), dtype=jnp.float32)

    # torch nn.Linear(d_in, d_out, bias=False) weight is (d_out, d_in);
    # transpose to (d_in, d_out) so y = x @ W matches torch's y = x @ W.T
    bound = 1.0 / math.sqrt(d_in)
    wq = jax.random.uniform(kq, (d_out, d_in), minval=-bound, maxval=bound).T
    wk = jax.random.uniform(kk, (d_out, d_in), minval=-bound, maxval=bound).T
    wv = jax.random.uniform(kv_, (d_out, d_in), minval=-bound, maxval=bound).T

    # --- f32 path on the tiny module shapes ---
    out = jax.block_until_ready(causal_attention(x, wq, wk, wv, dropout_p=dropout))
    ref = causal_attention_ref(x, wq, wk, wv)
    assert out.shape == (B, T, d_out)
    assert jnp.allclose(out, ref, atol=1e-2, rtol=1e-2), "f32 mismatch vs reference"

    # --- bf16 MXU operands (bf16 probabilities, f32 accumulation) ---
    out_bf16 = jax.block_until_ready(
        causal_attention(x.astype(jnp.bfloat16), wq.astype(jnp.bfloat16),
                         wk.astype(jnp.bfloat16), wv.astype(jnp.bfloat16),
                         dropout_p=dropout))
    assert jnp.allclose(out_bf16.astype(jnp.float32), ref, atol=1.5e-1, rtol=1e-1), \
        "bf16 mismatch vs reference"

    # --- larger sequence: multi-tile online softmax, lower-triangular flattened
    #     grid, mask skipped on fully-below-diagonal tiles ---
    B2, T2, d2 = 2, 256, 64
    k2 = jax.random.split(jax.random.PRNGKey(1), 4)
    x2 = jax.random.normal(k2[0], (B2, T2, d2), dtype=jnp.float32)
    b2 = 1.0 / math.sqrt(d2)
    wq2 = jax.random.uniform(k2[1], (d2, d2), minval=-b2, maxval=b2)
    wk2 = jax.random.uniform(k2[2], (d2, d2), minval=-b2, maxval=b2)
    wv2 = jax.random.uniform(k2[3], (d2, d2), minval=-b2, maxval=b2)
    out2 = jax.block_until_ready(
        causal_attention(x2, wq2, wk2, wv2, dropout_p=0.0, block_q=128, block_kv=128))
    ref2 = causal_attention_ref(x2, wq2, wk2, wv2)
    assert jnp.allclose(out2, ref2, atol=1e-2, rtol=1e-2), "tiled path mismatch vs reference"

    print("KERNEL_OK")
</pallas_src>

<mosaic_0001>
module attributes {stable_mosaic.version = 11 : i64} {
  func.func @_qkv_proj_kernel(%arg0: i32, %arg1: i32, %arg2: memref<16x32xf32, #tpu.memory_space<vmem>>, %arg3: memref<32x32xf32, #tpu.memory_space<vmem>>, %arg4: memref<32x32xf32, #tpu.memory_space<vmem>>, %arg5: memref<32x32xf32, #tpu.memory_space<vmem>>, %arg6: memref<16x32xf32, #tpu.memory_space<vmem>>, %arg7: memref<16x32xf32, #tpu.memory_space<vmem>>, %arg8: memref<16x32xf32, #tpu.memory_space<vmem>>) attributes {dimension_semantics = [#tpu.dimension_semantics<parallel>, #tpu.dimension_semantics<parallel>], iteration_bounds = array<i64: 1, 1>, scalar_prefetch = 0 : i64, scratch_operands = 0 : i64, tpu.core_type = #tpu.core_type<tc>, window_params = [{transform_indices = @transform_0, window_bounds = array<i64: 16, 32>}, {transform_indices = @transform_1, window_bounds = array<i64: 32, 32>}, {transform_indices = @transform_2, window_bounds = array<i64: 32, 32>}, {transform_indices = @transform_3, window_bounds = array<i64: 32, 32>}, {transform_indices = @transform_4, window_bounds = array<i64: 16, 32>}, {transform_indices = @transform_5, window_bounds = array<i64: 16, 32>}, {transform_indices = @transform_6, window_bounds = array<i64: 16, 32>}]} {
    %c0 = arith.constant 0 : index
    %c0_0 = arith.constant 0 : index
    %0 = vector.load %arg2[%c0, %c0_0] : memref<16x32xf32, #tpu.memory_space<vmem>>, vector<16x32xf32>
    %c0_1 = arith.constant 0 : index
    %c0_2 = arith.constant 0 : index
    %1 = vector.load %arg3[%c0_1, %c0_2] : memref<32x32xf32, #tpu.memory_space<vmem>>, vector<32x32xf32>
    %cst = arith.constant dense<0.000000e+00> : vector<16x32xf32>
    %2 = tpu.matmul %0, %1, %cst {dimension_numbers = #tpu.dot_dimension_numbers<[1], [0], [0], [1], [0, 0, 1, 1], [], []>} : vector<16x32xf32>, vector<32x32xf32>, vector<16x32xf32> -> vector<16x32xf32>
    %c0_3 = arith.constant 0 : index
    %c0_4 = arith.constant 0 : index
    %3 = vector.load %arg6[%c0_3, %c0_4] : memref<16x32xf32, #tpu.memory_space<vmem>>, vector<16x32xf32>
    tpu.vector_store %arg6[%c0_3, %c0_4], %2 {strides = array<i32>} : memref<16x32xf32, #tpu.memory_space<vmem>>, vector<16x32xf32>,
    %c0_5 = arith.constant 0 : index
    %c0_6 = arith.constant 0 : index
    %4 = vector.load %arg4[%c0_5, %c0_6] : memref<32x32xf32, #tpu.memory_space<vmem>>, vector<32x32xf32>
    %cst_7 = arith.constant dense<0.000000e+00> : vector<16x32xf32>
    %5 = tpu.matmul %0, %4, %cst_7 {dimension_numbers = #tpu.dot_dimension_numbers<[1], [0], [0], [1], [0, 0, 1, 1], [], []>} : vector<16x32xf32>, vector<32x32xf32>, vector<16x32xf32> -> vector<16x32xf32>
    %c0_8 = arith.constant 0 : index
    %c0_9 = arith.constant 0 : index
    %6 = vector.load %arg7[%c0_8, %c0_9] : memref<16x32xf32, #tpu.memory_space<vmem>>, vector<16x32xf32>
    tpu.vector_store %arg7[%c0_8, %c0_9], %5 {strides = array<i32>} : memref<16x32xf32, #tpu.memory_space<vmem>>, vector<16x32xf32>,
    %c0_10 = arith.constant 0 : index
    %c0_11 = arith.constant 0 : index
    %7 = vector.load %arg5[%c0_10, %c0_11] : memref<32x32xf32, #tpu.memory_space<vmem>>, vector<32x32xf32>
    %cst_12 = arith.constant dense<0.000000e+00> : vector<16x32xf32>
    %8 = tpu.matmul %0, %7, %cst_12 {dimension_numbers = #tpu.dot_dimension_numbers<[1], [0], [0], [1], [0, 0, 1, 1], [], []>} : vector<16x32xf32>, vector<32x32xf32>, vector<16x32xf32> -> vector<16x32xf32>
    %c0_13 = arith.constant 0 : index
    %c0_14 = arith.constant 0 : index
    %9 = vector.load %arg8[%c0_13, %c0_14] : memref<16x32xf32, #tpu.memory_space<vmem>>, vector<16x32xf32>
    tpu.vector_store %arg8[%c0_13, %c0_14], %8 {strides = array<i32>} : memref<16x32xf32, #tpu.memory_space<vmem>>, vector<16x32xf32>,
    return
  }
  func.func @transform_0(%arg0: i32, %arg1: i32) -> (i32, i32) {
    %c0_i32 = arith.constant 0 : i32
    %c0_i32_0 = arith.constant 0 : i32
    return %arg0, %c0_i32 : i32, i32
  }
  func.func @transform_1(%arg0: i32, %arg1: i32) -> (i32, i32) {
    %c0_i32 = arith.constant 0 : i32
    %c0_i32_0 = arith.constant 0 : i32
    return %c0_i32, %arg1 : i32, i32
  }
  func.func @transform_2(%arg0: i32, %arg1: i32) -> (i32, i32) {
    %c0_i32 = arith.constant 0 : i32
    %c0_i32_0 = arith.constant 0 : i32
    return %c0_i32, %arg1 : i32, i32
  }
  func.func @transform_3(%arg0: i32, %arg1: i32) -> (i32, i32) {
    %c0_i32 = arith.constant 0 : i32
    %c0_i32_0 = arith.constant 0 : i32
    return %c0_i32, %arg1 : i32, i32
  }
  func.func @transform_4(%arg0: i32, %arg1: i32) -> (i32, i32) {
    %c0_i32 = arith.constant 0 : i32
    return %arg0, %arg1 : i32, i32
  }
  func.func @transform_5(%arg0: i32, %arg1: i32) -> (i32, i32) {
    %c0_i32 = arith.constant 0 : i32
    return %arg0, %arg1 : i32, i32
  }
  func.func @transform_6(%arg0: i32, %arg1: i32) -> (i32, i32) {
    %c0_i32 = arith.constant 0 : i32
    return %arg0, %arg1 : i32, i32
  }
}

</mosaic_0001>

<llo_original>
// kernel: tpu_custom_call.1
$region0: #{tpu_custom_call.1}
  #allocation0 [shape = 'u32[]', space=smem, size = 0x4, offset = 0x4, fixed_abs, tag = 'smem constant byte address 0x4 - core index']
  #allocation1 [shape = 'u32[144,128]{1,0:T(1,128)}', space=vmem, size = 0x12000, scoped, tag = 'internal scratch']
  %s0 = inlined_call_operand.hbm [shape: f32[16,32], index: 0, kind: input, shape index: {}]
  %s1 = inlined_call_operand.hbm [shape: f32[32,32], index: 1, kind: input, shape index: {}]
  %s2 = inlined_call_operand.hbm [shape: f32[32,32], index: 2, kind: input, shape index: {}]
  %s3 = inlined_call_operand.hbm [shape: f32[32,32], index: 3, kind: input, shape index: {}]
  %s4 = inlined_call_operand.hbm [shape: f32[16,32], index: 4, kind: output, shape index: {0}]
  %s5 = inlined_call_operand.hbm [shape: f32[16,32], index: 5, kind: output, shape index: {1}]
  %s6 = inlined_call_operand.hbm [shape: f32[16,32], index: 6, kind: output, shape index: {2}]
  %7 = xla_tuple %s4, %s5, %s6
  %s8 = sld [smem:[#allocation0]]
  $region58: #{tpu_custom_call.1} parent=0
    _
  %s10 = ssub.s32 1, %s8
  %s11 = scalar_select 0, %s10, %s8
  $region1: #{tpu_custom_call.1} parent=0
    #allocation2 [shape = 'u8[8192]{0}', space=vmem, size = 0x2000, scoped, tag = 'input window, operand 0, single buffered']
    #allocation3 [shape = 's32[1]{0}', space=sflag, size = 0x4, scoped, tag = 'scoped memory for tpu_custom_call.1']
    #allocation4 [shape = 's32[1]{0}', space=sflag, size = 0x4, scoped, tag = 'scoped memory for tpu_custom_call.1']
    #allocation5 [shape = 'u8[16384]{0}', space=vmem, size = 0x4000, scoped, tag = 'input window, operand 1, single buffered']
    #allocation6 [shape = 's32[1]{0}', space=sflag, size = 0x4, scoped, tag = 'scoped memory for tpu_custom_call.1']
    #allocation7 [shape = 'u8[16384]{0}', space=vmem, size = 0x4000, scoped, tag = 'input window, operand 2, single buffered']
    #allocation8 [shape = 'u8[16384]{0}', space=vmem, size = 0x4000, scoped, tag = 'input window, operand 3, single buffered']
    #allocation9 [shape = 's32[1]{0}', space=sflag, size = 0x4, scoped, tag = 'scoped memory for tpu_custom_call.1']
    #allocation10 [shape = 'u8[8192]{0}', space=vmem, size = 0x2000, scoped, tag = 'output window, operand 0, single buffered']
    #allocation11 [shape = 'u8[8192]{0}', space=vmem, size = 0x2000, scoped, tag = 'output window, operand 1, single buffered']
    #allocation12 [shape = 's32[1]{0}', space=sflag, size = 0x4, scoped, tag = 'scoped memory for tpu_custom_call.1']
    #allocation13 [shape = 'u8[8192]{0}', space=vmem, size = 0x2000, scoped, tag = 'output window, operand 2, single buffered']
    %12 = vsyncpa [#allocation3], 0
    %13 = vsyncpa [#allocation6], 0
    %14 = vsyncpa [#allocation9], 0
    %15 = vsyncpa [#allocation4], 0
    %16 = vsyncpa [#allocation12], 0
    // Predicated region
    $region2: #{tpu_custom_call.1} parent=1 // pred_check
      _
    $region3: #{tpu_custom_call.1} parent=1 // pred_check_branch
      %18 = sbr.rel (0) target = $region5
    $region4: #{tpu_custom_call.1} parent=1 // pred_region
      %s20 = ssub.s32 256, 256
      %21 = vsyncadd [#allocation3], %s20
      %s22 = sshll.u32 [#allocation2], 4
      %s23 = int_to_ptr.vmem [resolvable:$true] %s22
      %28 = dma.hbm_to_vmem [thread:$0]  %s0, 256, %s23, [#allocation3], 128, 128, 8
    $region5: #{tpu_custom_call.1} parent=1 // pred_fallthru
      _
    // Predicated region
    $region6: #{tpu_custom_call.1} parent=1 // pred_check
      _
    $region7: #{tpu_custom_call.1} parent=1 // pred_check_branch
      %30 = sbr.rel (0) target = $region9
    $region8: #{tpu_custom_call.1} parent=1 // pred_region
      %s32 = ssub.s32 512, 512
      %33 = vsyncadd [#allocation6], %s32
      %s34 = sshll.u32 [#allocation5], 4
      %s35 = int_to_ptr.vmem [resolvable:$true] %s34
      %40 = dma.hbm_to_vmem [thread:$0]  %s1, 512, %s35, [#allocation6], 128, 128, 8
    $region9: #{tpu_custom_call.1} parent=1 // pred_fallthru
      _
    // Predicated region
    $region10: #{tpu_custom_call.1} parent=1 // pred_check
      _
    $region11: #{tpu_custom_call.1} parent=1 // pred_check_branch
      %42 = sbr.rel (0) target = $region13
    $region12: #{tpu_custom_call.1} parent=1 // pred_region
      %s44 = ssub.s32 512, 512
      %45 = vsyncadd [#allocation6], %s44
      %s46 = sshll.u32 [#allocation7], 4
      %s47 = int_to_ptr.vmem [resolvable:$true] %s46
      %52 = dma.hbm_to_vmem [thread:$0]  %s2, 512, %s47, [#allocation6], 128, 128, 8
    $region13: #{tpu_custom_call.1} parent=1 // pred_fallthru
      _
    // Predicated region
    $region14: #{tpu_custom_call.1} parent=1 // pred_check
      _
    $region15: #{tpu_custom_call.1} parent=1 // pred_check_branch
      %54 = sbr.rel (0) target = $region17
    $region16: #{tpu_custom_call.1} parent=1 // pred_region
      %s56 = ssub.s32 512, 512
      %57 = vsyncadd [#allocation9], %s56
      %s58 = sshll.u32 [#allocation8], 4
      %s59 = int_to_ptr.vmem [resolvable:$true] %s58
      %64 = dma.hbm_to_vmem [thread:$0]  %s3, 512, %s59, [#allocation9], 128, 128, 8
    $region17: #{tpu_custom_call.1} parent=1 // pred_fallthru
      _
    // Predicated region
    $region18: #{tpu_custom_call.1} parent=1 // pred_check
      _
    $region19: #{tpu_custom_call.1} parent=1 // pred_check_branch
      %66 = sbr.rel (0) target = $region21
    $region20: #{tpu_custom_call.1} parent=1 // pred_region
      %67 = dma.done [#allocation3], 256
    $region21: #{tpu_custom_call.1} parent=1 // pred_fallthru
      _
    // Predicated region
    $region22: #{tpu_custom_call.1} parent=1 // pred_check
      _
    $region23: #{tpu_custom_call.1} parent=1 // pred_check_branch
      %69 = sbr.rel (0) target = $region25
    $region24: #{tpu_custom_call.1} parent=1 // pred_region
      %70 = dma.done [#allocation6], 512
    $region25: #{tpu_custom_call.1} parent=1 // pred_fallthru
      _
    // Predicated region
    $region26: #{tpu_custom_call.1} parent=1 // pred_check
      _
    $region27: #{tpu_custom_call.1} parent=1 // pred_check_branch
      %72 = sbr.rel (0) target = $region29
    $region28: #{tpu_custom_call.1} parent=1 // pred_region
      %73 = dma.done [#allocation6], 512
    $region29: #{tpu_custom_call.1} parent=1 // pred_fallthru
      _
    // Predicated region
    $region30: #{tpu_custom_call.1} parent=1 // pred_check
      _
    $region31: #{tpu_custom_call.1} parent=1 // pred_check_branch
      %75 = sbr.rel (0) target = $region33
    $region32: #{tpu_custom_call.1} parent=1 // pred_region
      %76 = dma.done [#allocation9], 512
    $region33: #{tpu_custom_call.1} parent=1 // pred_fallthru
      _
    %v77 = vld [vmem:[#allocation2] sm:$0xff]
    %v78 = vld [vmem:[#allocation2 + $0x8] sm:$0xff]
    %v79 = vld [vmem:[#allocation5] sm:$0xff]
    %v80 = vld [vmem:[#allocation5 + $0x8] sm:$0xff]
    %v81 = vld [vmem:[#allocation5 + $0x10] sm:$0xff]
    %v82 = vld [vmem:[#allocation5 + $0x18] sm:$0xff]
    %vm83 = vcmask 261120
    %v85 = vsel %vm83, %v77, 0
    %v88 = vsel %vm83, %v78, 0
    %90 = vmatprep.subr.mxu0 0.0
    %91 = vmatpush1.msra.mxu0 %v79
    %92 = vmatprep.subr.mxu0 0.0
    %93 = vmatpush1.msra.mxu0 %v80
    %94 = vmatprep.subr.mxu0 0.0
    %95 = vmatpush1.msra.mxu0 %v81
    %96 = vmatprep.subr.mxu0 0.0
    %97 = vmatpush1.msra.mxu0 %v82
    %98 = vmatprep.subr.mxu0 0.0
    %99 = vmatpush1.msra.mxu0 0.0
    %100 = vmatprep.subr.mxu0 0.0
    %101 = vmatpush1.msra.mxu0 0.0
    %102 = vmatprep.subr.mxu0 0.0
    %103 = vmatpush1.msra.mxu0 0.0
    %104 = vmatprep.subr.mxu0 0.0
    %105 = vmatpush1.msra.mxu0 0.0
    %106 = vmatprep.subr.mxu0 0.0
    %107 = vmatpush1.msra.mxu0 0.0
    %108 = vmatprep.subr.mxu0 0.0
    %109 = vmatpush1.msra.mxu0 0.0
    %110 = vmatprep.subr.mxu0 0.0
    %111 = vmatpush1.msra.mxu0 0.0
    %112 = vmatprep.subr.mxu0 0.0
    %113 = vmatpush1.msra.mxu0 0.0
    %114 = vmatprep.subr.mxu0 0.0
    %115 = vmatpush1.msra.mxu0 0.0
    %116 = vmatprep.subr.mxu0 0.0
    %117 = vmatpush1.msra.mxu0 0.0
    %118 = vmatprep.subr.mxu0 0.0
    %119 = vmatpush1.msra.mxu0 0.0
    %120 = vmatprep.subr.mxu0 0.0
    %121 = vmatpush1.msra.mxu0 0.0
    %122 = vmatprep.subr.mxu0 0.0
    %123 = vmatpush1.msra.mxu0 0.0
    %124 = vmatprep.subr.mxu0 0.0
    %125 = vmatpush1.msra.mxu0 0.0
    %126 = vmatprep.subr.mxu0 0.0
    %127 = vmatpush1.msra.mxu0 0.0
    %128 = vmatprep.subr.mxu0 0.0
    %129 = vmatpush1.msra.mxu0 0.0
    %130 = vmatprep.subr.mxu0 0.0
    %131 = vmatpush1.msra.mxu0 0.0
    %132 = vmatprep.subr.mxu0 0.0
    %133 = vmatpush1.msra.mxu0 0.0
    %134 = vmatprep.subr.mxu0 0.0
    %135 = vmatpush1.msra.mxu0 0.0
    %136 = vmatprep.subr.mxu0 0.0
    %137 = vmatpush1.msra.mxu0 0.0
    %138 = vmatprep.subr.mxu0 0.0
    %139 = vmatpush1.msra.mxu0 0.0
    %140 = vmatprep.subr.mxu0 0.0
    %141 = vmatpush1.msra.mxu0 0.0
    %142 = vmatprep.subr.mxu0 0.0
    %143 = vmatpush1.msra.mxu0 0.0
    %144 = vmatprep.subr.mxu0 0.0
    %145 = vmatpush1.msra.mxu0 0.0
    %146 = vmatprep.subr.mxu0 0.0
    %147 = vmatpush1.msra.mxu0 0.0
    %148 = vmatprep.subr.mxu0 0.0
    %149 = vmatpush1.msra.mxu0 0.0
    %150 = vmatprep.subr.mxu0 0.0
    %151 = vmatpush1.msra.mxu0 0.0
    %152 = vmatprep.subr.mxu0 0.0
    %153 = vmatpush1.msra.mxu0 0.0
    %154 = vmatprep.mubr.f32.mxu0 0.0
    %155 = vmatmul.mubr.f32.gmra.mrb[0].mxu0 %v85
    %v156 = vpop.f32.mrb[0].mxu0
    %v157 = vadd.f32 0.0, %v156
    %v158 = vpop.f32.mrb[0].mxu0
    %159 = vmatprep.mubr.f32.mxu0 0.0
    %160 = vmatmul.mubr.f32.gmra.mrb[0].mxu0 %v88
    %v161 = vpop.f32.mrb[0].mxu0
    %v162 = vadd.f32 0.0, %v161
    %v163 = vpop.f32.mrb[0].mxu0
    %164 = vdwg.mxu0
    %165 = vst.msk [vmem:[#allocation10] sm:$0xff] %vm83, %v157
    %166 = vst.msk [vmem:[#allocation10 + $0x8] sm:$0xff] %vm83, %v162
    %v167 = vld [vmem:[#allocation7] sm:$0xff]
    %v168 = vld [vmem:[#allocation7 + $0x8] sm:$0xff]
    %v169 = vld [vmem:[#allocation7 + $0x10] sm:$0xff]
    %v170 = vld [vmem:[#allocation7 + $0x18] sm:$0xff]
    %171 = vmatprep.subr.mxu0 0.0
    %172 = vmatpush1.msra.mxu0 %v167
    %173 = vmatprep.subr.mxu0 0.0
    %174 = vmatpush1.msra.mxu0 %v168
    %175 = vmatprep.subr.mxu0 0.0
    %176 = vmatpush1.msra.mxu0 %v169
    %177 = vmatprep.subr.mxu0 0.0
    %178 = vmatpush1.msra.mxu0 %v170
    %179 = vmatprep.subr.mxu0 0.0
    %180 = vmatpush1.msra.mxu0 0.0
    %181 = vmatprep.subr.mxu0 0.0
    %182 = vmatpush1.msra.mxu0 0.0
    %183 = vmatprep.subr.mxu0 0.0
    %184 = vmatpush1.msra.mxu0 0.0
    %185 = vmatprep.subr.mxu0 0.0
    %186 = vmatpush1.msra.mxu0 0.0
    %187 = vmatprep.subr.mxu0 0.0
    %188 = vmatpush1.msra.mxu0 0.0
    %189 = vmatprep.subr.mxu0 0.0
    %190 = vmatpush1.msra.mxu0 0.0
    %191 = vmatprep.subr.mxu0 0.0
    %192 = vmatpush1.msra.mxu0 0.0
    %193 = vmatprep.subr.mxu0 0.0
    %194 = vmatpush1.msra.mxu0 0.0
    %195 = vmatprep.subr.mxu0 0.0
    %196 = vmatpush1.msra.mxu0 0.0
    %197 = vmatprep.subr.mxu0 0.0
    %198 = vmatpush1.msra.mxu0 0.0
    %199 = vmatprep.subr.mxu0 0.0
    %200 = vmatpush1.msra.mxu0 0.0
    %201 = vmatprep.subr.mxu0 0.0
    %202 = vmatpush1.msra.mxu0 0.0
    %203 = vmatprep.subr.mxu0 0.0
    %204 = vmatpush1.msra.mxu0 0.0
    %205 = vmatprep.subr.mxu0 0.0
    %206 = vmatpush1.msra.mxu0 0.0
    %207 = vmatprep.subr.mxu0 0.0
    %208 = vmatpush1.msra.mxu0 0.0
    %209 = vmatprep.subr.mxu0 0.0
    %210 = vmatpush1.msra.mxu0 0.0
    %211 = vmatprep.subr.mxu0 0.0
    %212 = vmatpush1.msra.mxu0 0.0
    %213 = vmatprep.subr.mxu0 0.0
    %214 = vmatpush1.msra.mxu0 0.0
    %215 = vmatprep.subr.mxu0 0.0
    %216 = vmatpush1.msra.mxu0 0.0
    %217 = vmatprep.subr.mxu0 0.0
    %218 = vmatpush1.msra.mxu0 0.0
    %219 = vmatprep.subr.mxu0 0.0
    %220 = vmatpush1.msra.mxu0 0.0
    %221 = vmatprep.subr.mxu0 0.0
    %222 = vmatpush1.msra.mxu0 0.0
    %223 = vmatprep.subr.mxu0 0.0
    %224 = vmatpush1.msra.mxu0 0.0
    %225 = vmatprep.subr.mxu0 0.0
    %226 = vmatpush1.msra.mxu0 0.0
    %227 = vmatprep.subr.mxu0 0.0
    %228 = vmatpush1.msra.mxu0 0.0
    %229 = vmatprep.subr.mxu0 0.0
    %230 = vmatpush1.msra.mxu0 0.0
    %231 = vmatprep.subr.mxu0 0.0
    %232 = vmatpush1.msra.mxu0 0.0
    %233 = vmatprep.subr.mxu0 0.0
    %234 = vmatpush1.msra.mxu0 0.0
    %235 = vmatprep.mubr.f32.mxu0 0.0
    %236 = vmatmul.mubr.f32.gmra.mrb[0].mxu0 %v85
    %v237 = vpop.f32.mrb[0].mxu0
    %v238 = vadd.f32 0.0, %v237
    %v239 = vpop.f32.mrb[0].mxu0
    %240 = vmatprep.mubr.f32.mxu0 0.0
    %241 = vmatmul.mubr.f32.gmra.mrb[0].mxu0 %v88
    %v242 = vpop.f32.mrb[0].mxu0
    %v243 = vadd.f32 0.0, %v242
    %v244 = vpop.f32.mrb[0].mxu0
    %245 = vdwg.mxu0
    %246 = vst.msk [vmem:[#allocation11] sm:$0xff] %vm83, %v238
    %247 = vst.msk [vmem:[#allocation11 + $0x8] sm:$0xff] %vm83, %v243
    %v248 = vld [vmem:[#allocation8] sm:$0xff]
    %v249 = vld [vmem:[#allocation8 + $0x8] sm:$0xff]
    %v250 = vld [vmem:[#allocation8 + $0x10] sm:$0xff]
    %v251 = vld [vmem:[#allocation8 + $0x18] sm:$0xff]
    %252 = vmatprep.subr.mxu0 0.0
    %253 = vmatpush1.msra.mxu0 %v248
    %254 = vmatprep.subr.mxu0 0.0
    %255 = vmatpush1.msra.mxu0 %v249
    %256 = vmatprep.subr.mxu0 0.0
    %257 = vmatpush1.msra.mxu0 %v250
    %258 = vmatprep.subr.mxu0 0.0
    %259 = vmatpush1.msra.mxu0 %v251
    %260 = vmatprep.subr.mxu0 0.0
    %261 = vmatpush1.msra.mxu0 0.0
    %262 = vmatprep.subr.mxu0 0.0
    %263 = vmatpush1.msra.mxu0 0.0
    %264 = vmatprep.subr.mxu0 0.0
    %265 = vmatpush1.msra.mxu0 0.0
    %266 = vmatprep.subr.mxu0 0.0
    %267 = vmatpush1.msra.mxu0 0.0
    %268 = vmatprep.subr.mxu0 0.0
    %269 = vmatpush1.msra.mxu0 0.0
    %270 = vmatprep.subr.mxu0 0.0
    %271 = vmatpush1.msra.mxu0 0.0
    %272 = vmatprep.subr.mxu0 0.0
    %273 = vmatpush1.msra.mxu0 0.0
    %274 = vmatprep.subr.mxu0 0.0
    %275 = vmatpush1.msra.mxu0 0.0
    %276 = vmatprep.subr.mxu0 0.0
    %277 = vmatpush1.msra.mxu0 0.0
    %278 = vmatprep.subr.mxu0 0.0
    %279 = vmatpush1.msra.mxu0 0.0
    %280 = vmatprep.subr.mxu0 0.0
    %281 = vmatpush1.msra.mxu0 0.0
    %282 = vmatprep.subr.mxu0 0.0
    %283 = vmatpush1.msra.mxu0 0.0
    %284 = vmatprep.subr.mxu0 0.0
    %285 = vmatpush1.msra.mxu0 0.0
    %286 = vmatprep.subr.mxu0 0.0
    %287 = vmatpush1.msra.mxu0 0.0
    %288 = vmatprep.subr.mxu0 0.0
    %289 = vmatpush1.msra.mxu0 0.0
    %290 = vmatprep.subr.mxu0 0.0
    %291 = vmatpush1.msra.mxu0 0.0
    %292 = vmatprep.subr.mxu0 0.0
    %293 = vmatpush1.msra.mxu0 0.0
    %294 = vmatprep.subr.mxu0 0.0
    %295 = vmatpush1.msra.mxu0 0.0
    %296 = vmatprep.subr.mxu0 0.0
    %297 = vmatpush1.msra.mxu0 0.0
    %298 = vmatprep.subr.mxu0 0.0
    %299 = vmatpush1.msra.mxu0 0.0
    %300 = vmatprep.subr.mxu0 0.0
    %301 = vmatpush1.msra.mxu0 0.0
    %302 = vmatprep.subr.mxu0 0.0
    %303 = vmatpush1.msra.mxu0 0.0
    %304 = vmatprep.subr.mxu0 0.0
    %305 = vmatpush1.msra.mxu0 0.0
    %306 = vmatprep.subr.mxu0 0.0
    %307 = vmatpush1.msra.mxu0 0.0
    %308 = vmatprep.subr.mxu0 0.0
    %309 = vmatpush1.msra.mxu0 0.0
    %310 = vmatprep.subr.mxu0 0.0
    %311 = vmatpush1.msra.mxu0 0.0
    %312 = vmatprep.subr.mxu0 0.0
    %313 = vmatpush1.msra.mxu0 0.0
    %314 = vmatprep.subr.mxu0 0.0
    %315 = vmatpush1.msra.mxu0 0.0
    %316 = vmatprep.mubr.f32.mxu0 0.0
    %317 = vmatmul.mubr.f32.gmra.mrb[0].mxu0 %v85
    %v318 = vpop.f32.mrb[0].mxu0
    %v319 = vadd.f32 0.0, %v318
    %v320 = vpop.f32.mrb[0].mxu0
    %321 = vmatprep.mubr.f32.mxu0 0.0
    %322 = vmatmul.mubr.f32.gmra.mrb[0].mxu0 %v88
    %v323 = vpop.f32.mrb[0].mxu0
    %v324 = vadd.f32 0.0, %v323
    %v325 = vpop.f32.mrb[0].mxu0
    %326 = vdwg.mxu0
    %327 = vst.msk [vmem:[#allocation13] sm:$0xff] %vm83, %v319
    %328 = vst.msk [vmem:[#allocation13 + $0x8] sm:$0xff] %vm83, %v324
    // Predicated region
    $region34: #{tpu_custom_call.1} parent=1 // pred_check
      _
    $region35: #{tpu_custom_call.1} parent=1 // pred_check_branch
      %330 = sbr.rel (0) target = $region37
    $region36: #{tpu_custom_call.1} parent=1 // pred_region
      %s332 = ssub.s32 256, 256
      %333 = vsyncadd [#allocation4], %s332
      %s334 = sshll.u32 [#allocation10], 4
      %s335 = int_to_ptr.vmem [resolvable:$true] %s334
      %340 = dma.vmem_to_hbm [thread:$0]  %s335, 256, %s4, [#allocation4], 128, 128, 8
    $region37: #{tpu_custom_call.1} parent=1 // pred_fallthru
      _
    // Predicated region
    $region38: #{tpu_custom_call.1} parent=1 // pred_check
      _
    $region39: #{tpu_custom_call.1} parent=1 // pred_check_branch
      %342 = sbr.rel (0) target = $region41
    $region40: #{tpu_custom_call.1} parent=1 // pred_region
      %s344 = ssub.s32 256, 256
      %345 = vsyncadd [#allocation12], %s344
      %s346 = sshll.u32 [#allocation11], 4
      %s347 = int_to_ptr.vmem [resolvable:$true] %s346
      %352 = dma.vmem_to_hbm [thread:$0]  %s347, 256, %s5, [#allocation12], 128, 128, 8
    $region41: #{tpu_custom_call.1} parent=1 // pred_fallthru
      _
    // Predicated region
    $region42: #{tpu_custom_call.1} parent=1 // pred_check
      _
    $region43: #{tpu_custom_call.1} parent=1 // pred_check_branch
      %354 = sbr.rel (0) target = $region45
    $region44: #{tpu_custom_call.1} parent=1 // pred_region
      %s356 = ssub.s32 256, 256
      %357 = vsyncadd [#allocation12], %s356
      %s358 = sshll.u32 [#allocation13], 4
      %s359 = int_to_ptr.vmem [resolvable:$true] %s358
      %364 = dma.vmem_to_hbm [thread:$0]  %s359, 256, %s6, [#allocation12], 128, 128, 8
    $region45: #{tpu_custom_call.1} parent=1 // pred_fallthru
      _
    // Predicated region
    $region46: #{tpu_custom_call.1} parent=1 // pred_check
      _
    $region47: #{tpu_custom_call.1} parent=1 // pred_check_branch
      %366 = sbr.rel (0) target = $region49
    $region48: #{tpu_custom_call.1} parent=1 // pred_region
      %367 = dma.done [#allocation4], 256
    $region49: #{tpu_custom_call.1} parent=1 // pred_fallthru
      _
    // Predicated region
    $region50: #{tpu_custom_call.1} parent=1 // pred_check
      _
    $region51: #{tpu_custom_call.1} parent=1 // pred_check_branch
      %369 = sbr.rel (0) target = $region53
    $region52: #{tpu_custom_call.1} parent=1 // pred_region
      %370 = dma.done [#allocation12], 256
    $region53: #{tpu_custom_call.1} parent=1 // pred_fallthru
      _
    // Predicated region
    $region54: #{tpu_custom_call.1} parent=1 // pred_check
      _
    $region55: #{tpu_custom_call.1} parent=1 // pred_check_branch
      %372 = sbr.rel (0) target = $region57
    $region56: #{tpu_custom_call.1} parent=1 // pred_region
      %373 = dma.done [#allocation12], 256
    $region57: #{tpu_custom_call.1} parent=1 // pred_fallthru
      _
    %374 = vsyncpa [#allocation3], 1
    %375 = vsyncpa [#allocation6], 1
    %376 = vsyncpa [#allocation9], 1
    %377 = vsyncpa [#allocation4], 1
    %378 = vsyncpa [#allocation12], 1

</llo_original>
